<compile_context>
chip_gen: v7x
topology: tpu7x:2x2x1
jax: 0.10.0
libtpu: 0.0.40
codegen_flags: <defaults>
</compile_context>

<pallas_src>
import functools

import jax
import jax.numpy as jnp
from jax.experimental import pallas as pl
from jax.experimental.pallas import tpu as pltpu


# ---------------------------------------------------------------------------
# Kernel: one block = (b_tile, F, hw_tile) slice of one sigma channel.
# ---------------------------------------------------------------------------
def _scale_pool_kernel(hw_tile, valid_last, factors_ref, x_ref, o_ref, acc_ref):
    # factors_ref : SMEM (S,) float32           (scalar prefetch)
    # x_ref       : VMEM (b_tile, F, hw_tile)   (sigma dim squeezed away)
    # o_ref       : VMEM (b_tile, F)
    # acc_ref     : VMEM (b_tile, F) float32 scratch accumulator
    s = pl.program_id(1)
    hw = pl.program_id(2)
    last_s = pl.num_programs(1) - 1
    last_hw = pl.num_programs(2) - 1

    @pl.when((s == 0) & (hw == 0))
    def _init():
        acc_ref[...] = jnp.zeros_like(acc_ref)

    def accumulate(valid):
        # Sum the first `valid` spatial lanes of this block into the accumulator.
        # `valid` is a Python int, so all slicing / masking below is static.
        full = (valid // 128) * 128
        partial = jnp.zeros(acc_ref.shape, dtype=jnp.float32)
        if full > 0:
            partial += jnp.sum(x_ref[:, :, :full].astype(jnp.float32), axis=-1)
        rem = valid - full
        if rem > 0:
            width = min(128, hw_tile - full)            # stay inside the block
            tail = x_ref[:, :, full:full + width].astype(jnp.float32)
            if rem < width:                             # mask only the straddling chunk
                lane = jax.lax.broadcasted_iota(jnp.int32, tail.shape, 2)
                tail = jnp.where(lane < rem, tail, 0.0)
            partial += jnp.sum(tail, axis=-1)
        acc_ref[...] += factors_ref[s] * partial

    if valid_last == hw_tile:
        accumulate(hw_tile)                             # no boundary block anywhere
    else:
        @pl.when(hw < last_hw)
        def _interior():                                # unmasked fast path
            accumulate(hw_tile)

        @pl.when(hw == last_hw)
        def _boundary():                                # masked only on the last hw block
            accumulate(valid_last)

    @pl.when((s == last_s) & (hw == last_hw))
    def _finalize():
        o_ref[...] = acc_ref[...].astype(o_ref.dtype)


# ---------------------------------------------------------------------------
# Tile / VMEM budgeting helpers (generation-aware).
# ---------------------------------------------------------------------------
def _round_up(x, m):
    return -(-x // m) * m


def _vmem_capacity_bytes():
    try:
        cap = int(pltpu.get_tpu_info().vmem_capacity_bytes)
        return min(max(cap, 16 << 20), 128 << 20)
    except Exception:
        return 64 << 20  # conservative fallback: v7x per-TensorCore VMEM


def _choose_tiles(B, F, HW, itemsize, target_block_bytes, vmem_cap):
    """Pick (b_tile, hw_tile) for the input block (b_tile, F, hw_tile)."""
    # Sub-32-bit dtypes pack along sublanes; the block's second-minor dim (F) pads up.
    min_sublane = 8 * max(1, 4 // itemsize)
    f_eff = _round_up(F, min_sublane)
    elem_bytes = 4  # budget at 4 B/elem so an f32 temp of a non-f32 block is covered

    # Cap the per-block budget so double-buffered inputs + headroom fit this chip's VMEM.
    usable = (vmem_cap * 3) // 4
    per_block_cap = max((usable - (4 << 20)) // 2, 512 << 10)
    block_bytes = min(target_block_bytes, per_block_cap)

    b_tile_min = B if B <= 8 else 8
    lane_budget = block_bytes // (elem_bytes * f_eff * b_tile_min)
    hw_tile = max(128, (lane_budget // 128) * 128)

    if hw_tile >= HW:
        # The full spatial extent fits in one lane-dense block; grow the batch tile.
        hw_tile = HW
        row_bytes = elem_bytes * f_eff * _round_up(HW, 128)
        b_budget = max(1, block_bytes // row_bytes)
        if B <= 8 or b_budget >= B:
            b_tile = B
        else:
            b_tile = max(8, min(B, (b_budget // 8) * 8))
        if B >= 16:
            # Keep >= 2 iterations on the leading "parallel" axis so v7x can shard the
            # stream across both TensorCores (harmless on single-TC v5e/v6e).
            b_tile = min(b_tile, max(8, ((B // 2) // 8) * 8))
    else:
        # Even one minimal batch tile at full HW blows the budget: stream HW in
        # 128-lane multiples at the minimum legal batch tile (8, or full B if B <= 8).
        b_tile = b_tile_min
    return b_tile, hw_tile


def _vmem_limit_bytes(F, b_tile, hw_tile, itemsize, vmem_cap):
    min_sublane = 8 * max(1, 4 // itemsize)
    in_elems = b_tile * _round_up(F, min_sublane) * _round_up(hw_tile, 128)
    in_block = in_elems * itemsize
    conv_temp = in_elems * 4 if itemsize < 4 else 0      # f32 temp for non-f32 inputs
    out_block = _round_up(b_tile, 8) * _round_up(F, 128) * itemsize
    scratch = _round_up(b_tile, 8) * _round_up(F, 128) * 4
    need = 2 * in_block + conv_temp + 2 * out_block + scratch + (8 << 20)
    return int(min(max(need, 32 << 20), vmem_cap))


# ---------------------------------------------------------------------------
# Public entry point.
# ---------------------------------------------------------------------------
def scale_pool(x, ratio, *, target_block_bytes=8 << 20):
    """Pallas implementation of ScalePool.forward: [B, S, F, H, W] -> [B, F]."""
    B, S, F, H, W = x.shape
    HW = H * W
    xf = x.reshape(B, S, F, HW)
    factors = jnp.asarray([ratio ** (-2 * i) for i in range(S)], dtype=jnp.float32)

    itemsize = jnp.dtype(x.dtype).itemsize
    vmem_cap = _vmem_capacity_bytes()
    b_tile, hw_tile = _choose_tiles(B, F, HW, itemsize, target_block_bytes, vmem_cap)
    n_b = pl.cdiv(B, b_tile)
    n_hw = pl.cdiv(HW, hw_tile)
    valid_last = HW - (n_hw - 1) * hw_tile
    vmem_limit = _vmem_limit_bytes(F, b_tile, hw_tile, itemsize, vmem_cap)

    grid_spec = pltpu.PrefetchScalarGridSpec(
        num_scalar_prefetch=1,                   # sigma factors land in SMEM
        grid=(n_b, S, n_hw),                     # reduction axes (sigma, hw) innermost
        in_specs=[
            # NOTE: pipeline_mode=pl.Buffered(3) is worth a sweep on v7x now that the
            # larger blocks still leave VMEM headroom; default double-buffering here.
            pl.BlockSpec(
                (b_tile, pl.Squeezed(), F, hw_tile),
                lambda b, s, hw, factors: (b, s, 0, hw),
            ),
        ],
        out_specs=pl.BlockSpec((b_tile, F), lambda b, s, hw, factors: (b, 0)),
        scratch_shapes=[pltpu.VMEM((b_tile, F), jnp.float32)],
    )
    return pl.pallas_call(
        functools.partial(_scale_pool_kernel, hw_tile, valid_last),
        out_shape=jax.ShapeDtypeStruct((B, F), x.dtype),
        grid_spec=grid_spec,
        compiler_params=pltpu.CompilerParams(
            dimension_semantics=("parallel", "arbitrary", "arbitrary"),
            vmem_limit_bytes=vmem_limit,
        ),
    )(factors, xf)


if __name__ == "__main__":
    def reference(x, ratio):
        B, S, F = x.shape[:3]
        summed = x.reshape(B, S, F, -1).astype(jnp.float32).sum(-1)
        fac = jnp.asarray([ratio ** (-2 * i) for i in range(S)], jnp.float32)
        return jnp.einsum("zsf,s->zf", summed, fac).astype(x.dtype)

    ratio = 2.0 ** (1.0 / 3.0)
    keys = jax.random.split(jax.random.PRNGKey(0), 4)

    # 1) small shape: single lane-dense block per sigma, grid (1, S, 1)
    x1 = jax.random.normal(keys[0], (2, 3, 4, 8, 8), dtype=jnp.float32)
    out1 = jax.block_until_ready(scale_pool(x1, ratio))
    assert out1.shape == (2, 4), out1.shape
    assert jnp.allclose(out1, reference(x1, ratio), atol=1e-4, rtol=1e-4)

    # 2) tiny block budget: streams HW in 128-lane tiles with a gated masked boundary
    x2 = jax.random.normal(keys[1], (3, 2, 8, 18, 18), dtype=jnp.float32)
    out2 = jax.block_until_ready(scale_pool(x2, ratio, target_block_bytes=4096))
    assert out2.shape == (3, 8), out2.shape
    assert jnp.allclose(out2, reference(x2, ratio), atol=1e-4, rtol=1e-4)

    # 3) B=16: batch axis split into two b_tile=8 tiles (leading "parallel" grid axis)
    x3 = jax.random.normal(keys[2], (16, 2, 4, 10, 10), dtype=jnp.float32)
    out3 = jax.block_until_ready(scale_pool(x3, ratio))
    assert out3.shape == (16, 4), out3.shape
    assert jnp.allclose(out3, reference(x3, ratio), atol=1e-4, rtol=1e-4)

    # 4) B=20: partial batch tile (OOB rows' writes dropped) + 128-aligned spatial extent
    x4 = jax.random.normal(keys[3], (20, 3, 16, 16, 16), dtype=jnp.float32)
    out4 = jax.block_until_ready(scale_pool(x4, ratio))
    assert out4.shape == (20, 16), out4.shape
    assert jnp.allclose(out4, reference(x4, ratio), atol=1e-4, rtol=1e-4)

    print("KERNEL_OK")
</pallas_src>

<mosaic_0001>
module attributes {stable_mosaic.version = 11 : i64} {
  func.func @_scale_pool_kernel(%arg0: i32, %arg1: i32, %arg2: i32, %arg3: memref<3xf32, #tpu.memory_space<smem>>, %arg4: memref<2x1x4x64xf32, #tpu.memory_space<vmem>>, %arg5: memref<2x4xf32, #tpu.memory_space<vmem>>, %arg6: memref<2x4xf32, #tpu.memory_space<vmem>>) attributes {dimension_semantics = [#tpu.dimension_semantics<parallel>, #tpu.dimension_semantics<arbitrary>, #tpu.dimension_semantics<arbitrary>], iteration_bounds = array<i64: 1, 3, 1>, scalar_prefetch = 1 : i64, scratch_operands = 1 : i64, tpu.core_type = #tpu.core_type<tc>, window_params = [{transform_indices = @transform_0, window_bounds = array<i64: 2, 1, 4, 64>}, {transform_indices = @transform_1, window_bounds = array<i64: 2, 4>}]} {
    %c0_i32 = arith.constant 0 : i32
    %0 = arith.cmpi eq, %arg1, %c0_i32 : i32
    %c0_i32_0 = arith.constant 0 : i32
    %1 = arith.cmpi eq, %arg2, %c0_i32_0 : i32
    %2 = arith.andi %0, %1 : i1
    %3 = arith.extui %2 : i1 to i32
    %c0_i32_1 = arith.constant 0 : i32
    %4 = arith.cmpi ne, %3, %c0_i32_1 : i32
    scf.if %4 {
      %cst_12 = arith.constant 0.000000e+00 : f32
      %22 = vector.broadcast %cst_12 : f32 to vector<2x4xf32>
      %c0_13 = arith.constant 0 : index
      %c0_14 = arith.constant 0 : index
      %23 = vector.load %arg6[%c0_13, %c0_14] : memref<2x4xf32, #tpu.memory_space<vmem>>, vector<2x4xf32>
      tpu.vector_store %arg6[%c0_13, %c0_14], %22 {strides = array<i32>} : memref<2x4xf32, #tpu.memory_space<vmem>>, vector<2x4xf32>,
    } else {
    }
    %cst = arith.constant 0.000000e+00 : f32
    %5 = vector.broadcast %cst : f32 to vector<2x4xf32>
    %c0 = arith.constant 0 : index
    %c0_2 = arith.constant 0 : index
    %c0_3 = arith.constant 0 : index
    %c0_4 = arith.constant 0 : index
    %6 = vector.load %arg4[%c0, %c0_2, %c0_3, %c0_4] : memref<2x1x4x64xf32, #tpu.memory_space<vmem>>, vector<2x1x4x64xf32>
    %7 = vector.shape_cast %6 : vector<2x1x4x64xf32> to vector<2x4x64xf32>
    %cst_5 = arith.constant dense<0.000000e+00> : vector<2x4xf32>
    %8 = vector.multi_reduction <add>, %7, %cst_5 [2] : vector<2x4x64xf32> to vector<2x4xf32>
    %9 = arith.addf %5, %8 : vector<2x4xf32>
    %c0_6 = arith.constant 0 : index
    %c0_7 = arith.constant 0 : index
    %10 = vector.load %arg6[%c0_6, %c0_7] : memref<2x4xf32, #tpu.memory_space<vmem>>, vector<2x4xf32>
    %11 = arith.index_cast %arg1 : i32 to index
    %12 = memref.load %arg3[%11] : memref<3xf32, #tpu.memory_space<smem>>
    %13 = vector.broadcast %12 : f32 to vector<2x4xf32>
    %14 = arith.mulf %13, %9 : vector<2x4xf32>
    %15 = arith.addf %10, %14 : vector<2x4xf32>
    %c0_8 = arith.constant 0 : index
    %c0_9 = arith.constant 0 : index
    %16 = vector.load %arg6[%c0_8, %c0_9] : memref<2x4xf32, #tpu.memory_space<vmem>>, vector<2x4xf32>
    tpu.vector_store %arg6[%c0_8, %c0_9], %15 {strides = array<i32>} : memref<2x4xf32, #tpu.memory_space<vmem>>, vector<2x4xf32>,
    %c2_i32 = arith.constant 2 : i32
    %17 = arith.cmpi eq, %arg1, %c2_i32 : i32
    %c0_i32_10 = arith.constant 0 : i32
    %18 = arith.cmpi eq, %arg2, %c0_i32_10 : i32
    %19 = arith.andi %17, %18 : i1
    %20 = arith.extui %19 : i1 to i32
    %c0_i32_11 = arith.constant 0 : i32
    %21 = arith.cmpi ne, %20, %c0_i32_11 : i32
    scf.if %21 {
      %c0_12 = arith.constant 0 : index
      %c0_13 = arith.constant 0 : index
      %22 = vector.load %arg6[%c0_12, %c0_13] : memref<2x4xf32, #tpu.memory_space<vmem>>, vector<2x4xf32>
      %c0_14 = arith.constant 0 : index
      %c0_15 = arith.constant 0 : index
      %23 = vector.load %arg5[%c0_14, %c0_15] : memref<2x4xf32, #tpu.memory_space<vmem>>, vector<2x4xf32>
      tpu.vector_store %arg5[%c0_14, %c0_15], %22 {strides = array<i32>} : memref<2x4xf32, #tpu.memory_space<vmem>>, vector<2x4xf32>,
    } else {
    }
    return
  }
  func.func @transform_0(%arg0: i32, %arg1: i32, %arg2: i32, %arg3: memref<3xf32, #tpu.memory_space<smem>>) -> (i32, i32, i32, i32) {
    %c0_i32 = arith.constant 0 : i32
    %c0_i32_0 = arith.constant 0 : i32
    return %arg0, %arg1, %c0_i32, %arg2 : i32, i32, i32, i32
  }
  func.func @transform_1(%arg0: i32, %arg1: i32, %arg2: i32, %arg3: memref<3xf32, #tpu.memory_space<smem>>) -> (i32, i32) {
    %c0_i32 = arith.constant 0 : i32
    %c0_i32_0 = arith.constant 0 : i32
    return %arg0, %c0_i32 : i32, i32
  }
}

</mosaic_0001>

<llo_original>
// kernel: tpu_custom_call.1
$region0: #{tpu_custom_call.1}
  #allocation0 [shape = 'u32[]', space=smem, size = 0x4, offset = 0x4, fixed_abs, tag = 'smem constant byte address 0x4 - core index']
  #allocation1 [shape = 'u32[144,128]{1,0:T(1,128)}', space=vmem, size = 0x12000, scoped, tag = 'internal scratch']
  #allocation2 [shape = 'f32[2,4]{1,0:T(2,128)}', space=vmem, size = 0x400, scoped, tag = 'scratch operand']
  #allocation3 [shape = 's32[1]{0}', space=sflag, size = 0x4, scoped, tag = 'scoped memory for tpu_custom_call.1']
  #allocation4 [shape = 'u8[512]{0}', space=smem, size = 0x200, scoped, tag = 'prefetched SMEM operand 0']
  %s0 = inlined_call_operand.hbm [shape: f32[3], index: 0, kind: input, shape index: {}]
  %s1 = inlined_call_operand.hbm [shape: f32[2,3,4,64], index: 1, kind: input, shape index: {}]
  %s2 = inlined_call_operand.hbm [shape: f32[2,4], index: 2, kind: output, shape index: {}]
  %s3 = sld [smem:[#allocation0]]
  $region49: #{tpu_custom_call.1} parent=0
    _
  %s5 = ssub.s32 1, %s3
  %s6 = scalar_select 0, %s5, %s3
  %8 = dma.hbm_to_smem %s0, 16, [#allocation4], [#allocation3]
  %9 = dma.done [#allocation3], 16
  %10 = sfence
  $region1: #{tpu_custom_call.1} parent=0
    #allocation5 [shape = 'u8[8192]{0}', space=vmem, size = 0x2000, scoped, tag = 'input window, operand 1']
    #allocation6 [shape = 's32[2]{0}', space=sflag, size = 0x8, scoped, tag = 'scoped memory for tpu_custom_call.1']
    #allocation7 [shape = 's32[2]{0}', space=sflag, size = 0x8, scoped, tag = 'scoped memory for tpu_custom_call.1']
    #allocation8 [shape = 'u8[1024]{0}', space=vmem, size = 0x400, scoped, tag = 'output window, operand 0, single buffered']
    %11 = vsyncpa [#allocation6], 0
    %s12 = scalar_lea.sflag [#allocation6], 1
    %13 = vsyncpa %s12, 0
    %14 = vsyncpa [#allocation7], 0
    loop: start=0, step=1, limit=5
    $region2: #{tpu_custom_call.1} parent=1 // loop_pre_header
      _
    $region3: #{tpu_custom_call.1} parent=1 // loop_header
      %s16 = sphi 0, %s20
      %p17 = scmp.ge.s32.totalorder %s16, 5
      %s23 = sphi 0, %s42
      %s24 = sphi 0, %s38
      %s25 = sphi 0, %s34
      %s26 = sphi 0, %s23
      %s27 = sphi 0, %s24
      %s28 = sphi 0, %s25
      %s29 = sphi 0, %s26
      %s30 = sphi 0, %s27
      %s31 = sphi 0, %s28
      %s49 = sphi 0, %s51
      %s52 = sphi 0, %s49
      %s53 = sphi 0, %s52
      %s69 = sphi 0, %s53
      %s75 = sphi 0, %s77
      %s78 = sphi 0, %s75
      %s79 = sphi 0, %s78
      %s95 = sphi 0, %s79
    $region4: #{tpu_custom_call.1} parent=1 // loop_header_branch
      %19 = sbr.rel (%p17) target = $region8
    $region5: #{tpu_custom_call.1} parent=1 // loop_body
      %s21 = ssub.s32 %s16, 1
      %s22 = ssub.s32 %s16, 2
      %s32 = sadd.s32 1, %s25
      %p33 = scmp.ge.s32.totalorder %s32, 1
      %s34 = scalar_select %p33, 0, %s32
      %s35 = sadd.s32 1, %s24
      %s36 = scalar_select %p33, %s35, %s24
      %p37 = scmp.ge.s32.totalorder %s36, 3
      %s38 = scalar_select %p37, 0, %s36
      %s39 = sadd.s32 1, %s23
      %s40 = scalar_select %p37, %s39, %s23
      %p41 = scmp.ge.s32.totalorder %s40, 1
      %s42 = scalar_select %p41, 0, %s40
      %s43 = ssub.s32 %s23, %s42
      %s44 = ssub.s32 %s24, %s38
      %s45 = sor.u32 %s43, %s44
      %s46 = ssub.s32 %s25, %s34
      %s47 = sor.u32 %s45, %s46
      %p48 = scmp.eq.s32.totalorder %s47, 0
      %s50 = sadd.s32 %s49, 1
      %s51 = scalar_select %p48, %s49, %s50
      %p54 = pneg %p48
      %p55 = scmp.eq.s32.totalorder %s16, 2
      %p56 = por %p54, %p55
      %p57 = scmp.ne.s32.totalorder %s49, %s52
      %p58 = scmp.eq.s32.totalorder %s16, 0
      %p59 = por %p57, %p58
      %p60 = scmp.ne.s32.totalorder %s49, %s52
      %p61 = scmp.eq.s32.totalorder %s21, 2
      %p62 = por %p60, %p61
      %p63 = scmp.ne.s32.totalorder %s52, %s53
      %p64 = scmp.eq.s32.totalorder %s21, 0
      %p65 = por %p63, %p64
      %p66 = scmp.ne.s32.totalorder %s52, %s53
      %p67 = scmp.eq.s32.totalorder %s22, 2
      %p68 = por %p66, %p67
      %p70 = scmp.ne.s32.totalorder %s53, %s69
      %p71 = scmp.eq.s32.totalorder %s22, 0
      %p72 = por %p70, %p71
      %s73 = ssub.s32 %s23, %s42
      %p74 = scmp.eq.s32.totalorder %s73, 0
      %s76 = sadd.s32 %s75, 1
      %s77 = scalar_select %p74, %s75, %s76
      %p80 = pneg %p74
      %p81 = scmp.eq.s32.totalorder %s16, 2
      %p82 = por %p80, %p81
      %p83 = scmp.ne.s32.totalorder %s75, %s78
      %p84 = scmp.eq.s32.totalorder %s16, 0
      %p85 = por %p83, %p84
      %p86 = scmp.ne.s32.totalorder %s75, %s78
      %p87 = scmp.eq.s32.totalorder %s21, 2
      %p88 = por %p86, %p87
      %p89 = scmp.ne.s32.totalorder %s78, %s79
      %p90 = scmp.eq.s32.totalorder %s21, 0
      %p91 = por %p89, %p90
      %p92 = scmp.ne.s32.totalorder %s78, %s79
      %p93 = scmp.eq.s32.totalorder %s22, 2
      %p94 = por %p92, %p93
      %p96 = scmp.ne.s32.totalorder %s79, %s95
      %p97 = scmp.eq.s32.totalorder %s22, 0
      %p98 = por %p96, %p97
      %p99 = scmp.le.s32.totalorder 1, %s16
      %p100 = scmp.lt.s32.totalorder %s16, 4
      %p101 = pnand %p99, %p100
      %p102 = pneg %p101
      // Predicated region
      $region9: #{tpu_custom_call.1} parent=5 // pred_check
        _
      $region10: #{tpu_custom_call.1} parent=5 // pred_check_branch
        %104 = sbr.rel (%p101) target = $region12
      $region11: #{tpu_custom_call.1} parent=5 // pred_region
        %s105 = ssub.s32 %s16, 1
      $region12: #{tpu_custom_call.1} parent=5 // pred_fallthru
        _
      %p106 = scmp.lt.s32.totalorder %s16, 3
      // Predicated region
      $region13: #{tpu_custom_call.1} parent=5 // pred_check
        %p107 = pneg %p106
      $region14: #{tpu_custom_call.1} parent=5 // pred_check_branch
        %109 = sbr.rel (%p107) target = $region16
      $region15: #{tpu_custom_call.1} parent=5 // pred_region
        // Predicated region
        $region17: #{tpu_custom_call.1} parent=15 // pred_check
          %p110 = pneg %p59
        $region18: #{tpu_custom_call.1} parent=15 // pred_check_branch
          %112 = sbr.rel (%p110) target = $region20
        $region19: #{tpu_custom_call.1} parent=15 // pred_region
          %s113 = sand.u32 %s49, 1
          %s114 = scalar_lea.sflag [#allocation6], %s113
          %s115 = sand.u32 %s49, 1
          %s116 = smul.addr %s115, 8
          %s117 = scalar_lea.vmem [#allocation5], %s116
          %s118 = smul.u32 2, %s23
          %s120 = ssub.s32 128, 128
          %121 = vsyncadd %s114, %s120
          %s122 = sadd.s32 %s25, %s24
          %s123 = smul.addr %s118, 3
          %s124 = sadd.s32 %s122, %s123
          %s125 = smul.addr %s124, 64
          %s126 = scalar_lea.hbm %s1, %s125
          %s127 = sshll.u32 %s117, 4
          %s128 = int_to_ptr.vmem [resolvable:$true] %s127
          %133 = dma.hbm_to_vmem [thread:$0]  %s126, 128, %s128, %s114, 192, 64, 4
        $region20: #{tpu_custom_call.1} parent=15 // pred_fallthru
          _
      $region16: #{tpu_custom_call.1} parent=5 // pred_fallthru
        _
      %p134 = scmp.le.s32.totalorder 1, %s16
      %p135 = scmp.lt.s32.totalorder %s16, 4
      %p136 = pnand %p134, %p135
      %p137 = pneg %p136
      // Predicated region
      $region21: #{tpu_custom_call.1} parent=5 // pred_check
        _
      $region22: #{tpu_custom_call.1} parent=5 // pred_check_branch
        %139 = sbr.rel (%p136) target = $region24
      $region23: #{tpu_custom_call.1} parent=5 // pred_region
        %s140 = ssub.s32 %s16, 1
        %s141 = sand.u32 %s52, 1
        %s142 = scalar_lea.sflag [#allocation6], %s141
        %s143 = sand.u32 %s52, 1
        %s144 = smul.addr %s143, 8
        %s145 = scalar_lea.vmem [#allocation5], %s144
        // Predicated region
        $region25: #{tpu_custom_call.1} parent=23 // pred_check
          %p146 = pneg %p65
        $region26: #{tpu_custom_call.1} parent=23 // pred_check_branch
          %148 = sbr.rel (%p146) target = $region28
        $region27: #{tpu_custom_call.1} parent=23 // pred_region
          %149 = dma.done %s142, 128
        $region28: #{tpu_custom_call.1} parent=23 // pred_fallthru
          _
        %s150 = sand.u32 %s52, 1
        %s151 = scalar_lea.sflag [#allocation6], %s150
        %s152 = sand.u32 %s52, 1
        %s153 = smul.addr %s152, 8
        %s154 = scalar_lea.vmem [#allocation5], %s153
        %p155 = pneg %p65
        %p156 = pneg %p62
        %p157 = pneg %p91
        %p158 = pneg %p88
        %s159 = smul.u32 2, %s26
        %p160 = scmp.eq.s32.totalorder %s27, 0
        %p161 = scmp.eq.s32.totalorder %s28, 0
        %p162 = pnand %p160, %p161
        %p163 = pneg %p162
        // Predicated region
        $region29: #{tpu_custom_call.1} parent=23 // pred_check
          _
        $region30: #{tpu_custom_call.1} parent=23 // pred_check_branch
          %165 = sbr.rel (%p162) target = $region32
        $region31: #{tpu_custom_call.1} parent=23 // pred_region
          %vm166 = vcmask 25600
          %167 = vst.msk [vmem:[#allocation2] sm:$0x3] %vm166, 0.0
        $region32: #{tpu_custom_call.1} parent=23 // pred_fallthru
          _
        %v168 = vld [vmem:[%s145] sm:$0xf]
        %v169 = vld [vmem:[%s145 + $0x4] sm:$0xf]
        %vm170 = vcmask 519168
        %v171 = vsel %vm170, %v168, 0.0
        %172 = vadd.xlane.f32.xlu0 %v171
        %v173 = vpop.xlane.xlu0 %172
        %v174 = vsel %vm170, %v169, 0.0
        %175 = vadd.xlane.f32.xlu0 %v174
        %v176 = vpop.xlane.xlu0 %175
        %v177 = vadd.f32 %v173, 0.0
        %v178 = vadd.f32 %v176, 0.0
        %v179 = vld [vmem:[#allocation2] sm:$0x3]
        %s180 = sld [smem:[#allocation4 + %s27]]
        %v181 = vstv %s180
        %v182 = vmul.f32 %v181, %v177
        %v183 = vmul.f32 %v181, %v178
        %v186 = vlaneseq
        %v187 = vand.u32 %v186, 127
        %v188 = vlaneseq
        %v189 = vshrl.u32 %v188, 7
        %v190 = vsub.s32 %v187, %v189
        %v191 = vrot.slane %v182, %v190
        %v192 = vlaneseq
        %v193 = vshrl.u32 %v192, 7
        %v194 = vsub.s32 %v187, %v193
        %v195 = vrot.slane %v183, %v194
        %vm196 = vcmask 1041409
        %v197 = vsel %vm196, %v195, %v191
        %v199 = vadd.f32 %v179, %v197
        %vm200 = vcmask 25600
        %201 = vst.msk [vmem:[#allocation2] sm:$0x3] %vm200, %v199
        %p202 = scmp.eq.s32.totalorder %s27, 2
        %p203 = pnand %p202, %p161
        %p204 = pneg %p203
        // Predicated region
        $region33: #{tpu_custom_call.1} parent=23 // pred_check
          _
        $region34: #{tpu_custom_call.1} parent=23 // pred_check_branch
          %206 = sbr.rel (%p203) target = $region36
        $region35: #{tpu_custom_call.1} parent=23 // pred_region
          %v207 = vld [vmem:[#allocation2] sm:$0x3]
          %208 = vst.msk [vmem:[#allocation8] sm:$0x3] %vm200, %v207
        $region36: #{tpu_custom_call.1} parent=23 // pred_fallthru
          _
        // Predicated region
        $region37: #{tpu_custom_call.1} parent=23 // pred_check
          %p209 = pneg %p88
        $region38: #{tpu_custom_call.1} parent=23 // pred_check_branch
          %211 = sbr.rel (%p209) target = $region40
        $region39: #{tpu_custom_call.1} parent=23 // pred_region
          %s213 = ssub.s32 32, 32
          %214 = vsyncadd [#allocation7], %s213
          %s215 = smul.addr %s26, 32
          %s216 = scalar_lea.hbm %s2, %s215
          %s218 = sshll.u32 [#allocation8], 4
          %s219 = int_to_ptr.vmem [resolvable:$true] %s218
          %221 = dma.vmem_to_hbm [thread:$0]  %s219, 32, %s216, [#allocation7]
        $region40: #{tpu_custom_call.1} parent=23 // pred_fallthru
          _
        // Predicated region
        $region41: #{tpu_custom_call.1} parent=23 // pred_check
          %p222 = pneg %p88
        $region42: #{tpu_custom_call.1} parent=23 // pred_check_branch
          %224 = sbr.rel (%p222) target = $region44
        $region43: #{tpu_custom_call.1} parent=23 // pred_region
          %225 = dma.done [#allocation7], 32
        $region44: #{tpu_custom_call.1} parent=23 // pred_fallthru
          _
      $region24: #{tpu_custom_call.1} parent=5 // pred_fallthru
        _
      %p226 = scmp.le.s32.totalorder 2, %s16
      // Predicated region
      $region45: #{tpu_custom_call.1} parent=5 // pred_check
        %p227 = pneg %p226
      $region46: #{tpu_custom_call.1} parent=5 // pred_check_branch
        %229 = sbr.rel (%p227) target = $region48
      $region47: #{tpu_custom_call.1} parent=5 // pred_region
        %s230 = ssub.s32 %s16, 2
      $region48: #{tpu_custom_call.1} parent=5 // pred_fallthru
        _
    $region6: #{tpu_custom_call.1} parent=1 // loop_footer
      %s20 = sadd.s32 1, %s16
    $region7: #{tpu_custom_call.1} parent=1 // loop_footer_branch
      %15 = sbr.rel target = $region3
    $region8: #{tpu_custom_call.1} parent=1 // loop_exit
      _
    %231 = vsyncpa [#allocation6], 1
    %s232 = scalar_lea.sflag [#allocation6], 1
    %233 = vsyncpa %s232, 1
    %234 = vsyncpa [#allocation7], 1
    %s235 = scalar_lea.sflag [#allocation7], 1
    %236 = vsyncpa %s235, 1

</llo_original>
